<compile_context>
chip_gen: v7x
topology: tpu7x:2x2x1
jax: 0.10.0
libtpu: 0.0.40
codegen_flags: <defaults>
</compile_context>

<pallas_src>
import functools

import jax
import jax.numpy as jnp
from jax.experimental import pallas as pl
from jax.experimental.pallas import tpu as pltpu


# ---------------------------- budgets / tiling ----------------------------
_VMEM_LIMIT = 48 * 1024 * 1024        # explicit scoped-VMEM request: > v5e 16 MiB
                                      # default, <= v7x 64 MiB physical (headroom)
_FUSED_WS_LIMIT = 36 * 1024 * 1024    # gate for the fused path (~2x in + 2x out + f32 temp)
_STREAM_BUDGET = 6 * 1024 * 1024      # per-x-block budget for the streaming fallback
_MAX_TS = 8192                        # spatial tile cap (multiple of 128)


def _round_up(x, m):
    return ((x + m - 1) // m) * m


def _spatial_tile(S):
    # Full-extent last-dim blocks are always legal; otherwise a 128-multiple
    # tile with the ragged edge masked inside the kernel.
    return S if S <= _MAX_TS else _MAX_TS


def _row_tile(M, TS, itemsize):
    # dtype-aware sublane alignment: (8,128) f32, (16,128) bf16, (32,128) int8.
    align = max(8, 32 // itemsize)
    if M <= align:
        return M                      # full extent: always a legal block dim
    tr = (_STREAM_BUDGET // (TS * itemsize)) // align * align
    tr = max(align, min(tr, (M // align) * align))
    if pl.cdiv(M, tr) < 2:            # keep >=2 blocks on the parallel row axis
        tr = max(align, _round_up(pl.cdiv(M, 2), align))   # (v7x: feed both TCs)
    return tr


# ======================= fused single-pass path =======================
def _fused_res_block_kernel(x_ref, w1_ref, b1_ref, w2_ref, b2_ref, o_ref, *, S):
    """One resident (C, S) slab per sample: pooling + channel MLP + scale + residual."""
    xv = x_ref[0].astype(jnp.float32)                            # (C, S)
    avg = jnp.sum(xv, axis=1, keepdims=True) * (1.0 / S)         # AdaptiveAvgPool3d(1)
    mx = jnp.max(xv, axis=1, keepdims=True)                      # AdaptiveMaxPool3d(1)

    def fc(v):  # v: (C, 1) column; fc = Conv(C->Cr) -> ReLU -> Conv(Cr->C), f32 accumulate
        h = jnp.dot(w1_ref[...], v, preferred_element_type=jnp.float32) + b1_ref[...]
        h = jnp.maximum(h, 0.0)                                  # (Cr, 1)
        return jnp.dot(w2_ref[...], h, preferred_element_type=jnp.float32) + b2_ref[...]

    s = fc(avg) + fc(mx)            # (C, 1); fc2 bias added in both branches (matches module)
    gain = 1.0 + 1.0 / (1.0 + jnp.exp(-s))                       # 1 + sigmoid
    o_ref[0] = (xv * gain).astype(o_ref.dtype)                   # x + CA(x)*x in one pass


def _res_block_fused(params, x3, S):
    N, C, _ = x3.shape
    cr = params["fc1_w"].shape[0]
    kernel = functools.partial(_fused_res_block_kernel, S=S)
    return pl.pallas_call(
        kernel,
        out_shape=jax.ShapeDtypeStruct(x3.shape, x3.dtype),
        grid=(N,),
        in_specs=[
            pl.BlockSpec((1, C, S), lambda i: (i, 0, 0)),
            pl.BlockSpec((cr, C), lambda i: (0, 0)),
            pl.BlockSpec((cr, 1), lambda i: (0, 0)),
            pl.BlockSpec((C, cr), lambda i: (0, 0)),
            pl.BlockSpec((C, 1), lambda i: (0, 0)),
        ],
        out_specs=pl.BlockSpec((1, C, S), lambda i: (i, 0, 0)),
        compiler_params=pltpu.CompilerParams(
            dimension_semantics=("parallel",),       # sample axis: v7x megacore splits it
            vmem_limit_bytes=_VMEM_LIMIT),
    )(x3, params["fc1_w"], params["fc1_b"].reshape(cr, 1),
      params["fc2_w"], params["fc2_b"].reshape(C, 1))


# ================ fallback pass 1: fused global avg(sum) + max pooling ================
def _pool_kernel(x_ref, sum_ref, max_ref, psum, pmax, *, S, TS, need_mask):
    j = pl.program_id(1)

    @pl.when(j == 0)
    def _():
        psum[...] = jnp.zeros_like(psum)
        pmax[...] = jnp.full(pmax.shape, -jnp.inf, dtype=pmax.dtype)

    xv = x_ref[...].astype(jnp.float32)
    if need_mask:  # static (trace-time): only emitted for ragged S
        col = j * TS + jax.lax.broadcasted_iota(jnp.int32, xv.shape, 1)
        valid = col < S
        xs = jnp.where(valid, xv, 0.0)
        xm = jnp.where(valid, xv, -jnp.inf)
    else:
        xs, xm = xv, xv

    if TS % 128 == 0:
        # Fold lane-blocks into a lane-wide (TR, 128) accumulator with VPU ops:
        # no per-step XLU reduce and no 1-wide masked store.
        acc_s, acc_m = xs[:, :128], xm[:, :128]
        for c in range(1, TS // 128):
            sl = slice(c * 128, (c + 1) * 128)
            acc_s = acc_s + xs[:, sl]
            acc_m = jnp.maximum(acc_m, xm[:, sl])
        psum[...] += acc_s
        pmax[...] = jnp.maximum(pmax[...], acc_m)
    else:  # TS == S (full extent, not lane aligned): reduce directly into column 0
        psum[:, 0:1] += jnp.sum(xs, axis=1, keepdims=True)
        pmax[:, 0:1] = jnp.maximum(pmax[:, 0:1], jnp.max(xm, axis=1, keepdims=True))

    @pl.when(j == pl.num_programs(1) - 1)
    def _():  # single final cross-lane reduce + narrow store
        sum_ref[...] = jnp.sum(psum[...], axis=1, keepdims=True)
        max_ref[...] = jnp.max(pmax[...], axis=1, keepdims=True)


def global_sum_max(x2d, *, ts, tr):
    """x2d: (M, S) -> per-row (sum, max), each (M, 1) float32."""
    M, S = x2d.shape
    grid = (pl.cdiv(M, tr), pl.cdiv(S, ts))
    kernel = functools.partial(_pool_kernel, S=S, TS=ts, need_mask=(S % ts) != 0)
    return pl.pallas_call(
        kernel,
        out_shape=(jax.ShapeDtypeStruct((M, 1), jnp.float32),
                   jax.ShapeDtypeStruct((M, 1), jnp.float32)),
        grid=grid,
        in_specs=[pl.BlockSpec((tr, ts), lambda i, j: (i, j))],
        out_specs=(pl.BlockSpec((tr, 1), lambda i, j: (i, 0)),
                   pl.BlockSpec((tr, 1), lambda i, j: (i, 0))),
        scratch_shapes=[pltpu.VMEM((tr, 128), jnp.float32),
                        pltpu.VMEM((tr, 128), jnp.float32)],
        compiler_params=pltpu.CompilerParams(
            dimension_semantics=("parallel", "arbitrary"),
            vmem_limit_bytes=_VMEM_LIMIT),
    )(x2d)


# ---------------- fallback: channel-attention MLP on the tiny pooled tensors ----------------
def _ca_mlp_kernel(avg_ref, max_ref, w1t_ref, b1_ref, w2t_ref, b2_ref, gain_ref):
    # avg/max: (N, C); w1t: (C, Cr); b1: (1, Cr); w2t: (Cr, C); b2: (1, C)
    def fc(v):  # dense contractions, f32 accumulate
        h = jnp.dot(v, w1t_ref[...], preferred_element_type=jnp.float32) + b1_ref[...]
        h = jnp.maximum(h, 0.0)                                  # (N, Cr)
        return jnp.dot(h, w2t_ref[...], preferred_element_type=jnp.float32) + b2_ref[...]

    s = fc(avg_ref[...].astype(jnp.float32)) + fc(max_ref[...].astype(jnp.float32))
    # gain = 1 + sigmoid(s): lets the apply pass compute x + CA(x)*x in one shot.
    gain_ref[...] = (1.0 + 1.0 / (1.0 + jnp.exp(-s))).astype(gain_ref.dtype)


def channel_attention_gain(avg, mx, params):
    N, C = avg.shape
    cr = params["fc1_w"].shape[0]
    return pl.pallas_call(
        _ca_mlp_kernel,
        out_shape=jax.ShapeDtypeStruct((N, C), jnp.float32),
    )(avg, mx, params["fc1_w"].T, params["fc1_b"].reshape(1, cr),
      params["fc2_w"].T, params["fc2_b"].reshape(1, C))


# ---------------- fallback pass 2: fused scale + residual:  out = x * (1 + attn) ----------------
def _apply_kernel(x_ref, g_ref, o_ref):
    o_ref[...] = (x_ref[...].astype(jnp.float32) * g_ref[...]).astype(o_ref.dtype)


def apply_gain(x2d, gain_col, *, ts, tr):
    # NOTE: if the caller can donate x, input_output_aliases={0: 0} would avoid a
    # second |x|-sized HBM buffer (traffic is unchanged); kept non-aliased here.
    M, S = x2d.shape
    grid = (pl.cdiv(M, tr), pl.cdiv(S, ts))
    return pl.pallas_call(
        _apply_kernel,
        out_shape=jax.ShapeDtypeStruct((M, S), x2d.dtype),
        grid=grid,
        in_specs=[pl.BlockSpec((tr, ts), lambda i, j: (i, j)),
                  pl.BlockSpec((tr, 1), lambda i, j: (i, 0))],
        out_specs=pl.BlockSpec((tr, ts), lambda i, j: (i, j)),
        compiler_params=pltpu.CompilerParams(
            dimension_semantics=("parallel", "parallel"),
            vmem_limit_bytes=_VMEM_LIMIT),
    )(x2d, gain_col)


# ---------------------------- parameters & forward ----------------------------
def init_params(key, C, ratio=16):
    cr = max(1, C // ratio)  # PyTorch default ratio=16
    k1, k2, k3, k4 = jax.random.split(key, 4)
    return {
        "fc1_w": 0.3 * jax.random.normal(k1, (cr, C), jnp.float32),  # Conv3d(C, Cr, 1)
        "fc1_b": 0.1 * jax.random.normal(k2, (cr,), jnp.float32),
        "fc2_w": 0.3 * jax.random.normal(k3, (C, cr), jnp.float32),  # Conv3d(Cr, C, 1)
        "fc2_b": 0.1 * jax.random.normal(k4, (C,), jnp.float32),
    }


def res_block(params, x, *, force_two_pass=False):
    """x: (N, C, D, H, W) -> (N, C, D, H, W);  out = x + ChannelAttention(x) * x."""
    N, C, D, H, W = x.shape
    S = D * H * W
    itemsize = jnp.dtype(x.dtype).itemsize

    # Fused path: ~2x(in)+2x(out) double-buffered sample blocks + an f32 temp.
    fused_ws = C * S * (4 * itemsize + 4)
    if (not force_two_pass) and fused_ws <= _FUSED_WS_LIMIT:
        out3 = _res_block_fused(params, x.reshape(N, C, S), S)   # single |x| read + write
        return out3.reshape(N, C, D, H, W)

    # Two-pass streaming fallback (large C*S).
    x2 = x.reshape(N * C, S)                 # free reshape, native NCDHW layout
    ts = _spatial_tile(S)
    tr = _row_tile(N * C, ts, itemsize)

    sums, maxs = global_sum_max(x2, ts=ts, tr=tr)   # one read of x
    avg = sums.reshape(N, C) * (1.0 / S)            # AdaptiveAvgPool3d(1)
    mx = maxs.reshape(N, C)                         # AdaptiveMaxPool3d(1)

    gain = channel_attention_gain(avg, mx, params)            # (N, C), tiny
    out2 = apply_gain(x2, gain.reshape(N * C, 1), ts=ts, tr=tr)  # one read + one write of x
    return out2.reshape(N, C, D, H, W)


# ---------------------------- pure-JAX reference ----------------------------
def res_block_reference(params, x):
    hi = jax.lax.Precision.HIGHEST
    avg = jnp.mean(x, axis=(2, 3, 4))
    mx = jnp.max(x, axis=(2, 3, 4))

    def fc(v):
        h = jnp.maximum(jnp.dot(v, params["fc1_w"].T, precision=hi) + params["fc1_b"], 0.0)
        return jnp.dot(h, params["fc2_w"].T, precision=hi) + params["fc2_b"]

    s = fc(avg) + fc(mx)
    attn = 1.0 / (1.0 + jnp.exp(-s))
    return x + attn[:, :, None, None, None] * x


if __name__ == "__main__":
    key = jax.random.PRNGKey(0)
    kp, kx, kx2 = jax.random.split(key, 3)

    # --- fused single-pass path (whole (C, S) slab resident in VMEM) ---
    N, C, D, H, W = 2, 32, 8, 8, 8          # ratio=16 -> hidden channels = 2; S = 512
    params = init_params(kp, C)
    x = jax.random.normal(kx, (N, C, D, H, W), jnp.float32)

    out = jax.block_until_ready(jax.jit(res_block)(params, x))
    ref = res_block_reference(params, x)
    assert out.shape == (N, C, D, H, W), out.shape
    assert bool(jnp.all(jnp.isfinite(out)))
    assert bool(jnp.allclose(out, ref, rtol=1e-3, atol=1e-3)), \
        float(jnp.max(jnp.abs(out - ref)))

    # --- two-pass streaming fallback on the same input ---
    out2 = jax.block_until_ready(
        jax.jit(functools.partial(res_block, force_two_pass=True))(params, x))
    assert bool(jnp.allclose(out2, ref, rtol=1e-3, atol=1e-3)), \
        float(jnp.max(jnp.abs(out2 - ref)))

    # --- fallback with ragged spatial tiling (exercises masked reduction path) ---
    N3, C3, D3, H3, W3 = 1, 16, 21, 21, 21   # S = 9261 > spatial tile cap
    params3 = init_params(kp, C3, ratio=4)
    x3 = jax.random.normal(kx2, (N3, C3, D3, H3, W3), jnp.float32)
    out3 = jax.block_until_ready(
        jax.jit(functools.partial(res_block, force_two_pass=True))(params3, x3))
    ref3 = res_block_reference(params3, x3)
    assert bool(jnp.allclose(out3, ref3, rtol=1e-3, atol=1e-3)), \
        float(jnp.max(jnp.abs(out3 - ref3)))

    print("KERNEL_OK")
</pallas_src>

<mosaic_0001>
module attributes {stable_mosaic.version = 11 : i64} {
  func.func @_fused_res_block_kernel(%arg0: i32, %arg1: memref<1x32x512xf32, #tpu.memory_space<vmem>>, %arg2: memref<2x32xf32, #tpu.memory_space<vmem>>, %arg3: memref<2x1xf32, #tpu.memory_space<vmem>>, %arg4: memref<32x2xf32, #tpu.memory_space<vmem>>, %arg5: memref<32x1xf32, #tpu.memory_space<vmem>>, %arg6: memref<1x32x512xf32, #tpu.memory_space<vmem>>) attributes {dimension_semantics = [#tpu.dimension_semantics<parallel>], iteration_bounds = array<i64: 2>, scalar_prefetch = 0 : i64, scratch_operands = 0 : i64, tpu.core_type = #tpu.core_type<tc>, window_params = [{transform_indices = @transform_0, window_bounds = array<i64: 1, 32, 512>}, {pipeline_mode = #tpu.pipeline_mode<synchronous>, transform_indices = @transform_1, window_bounds = array<i64: 2, 32>}, {pipeline_mode = #tpu.pipeline_mode<synchronous>, transform_indices = @transform_2, window_bounds = array<i64: 2, 1>}, {pipeline_mode = #tpu.pipeline_mode<synchronous>, transform_indices = @transform_3, window_bounds = array<i64: 32, 2>}, {pipeline_mode = #tpu.pipeline_mode<synchronous>, transform_indices = @transform_4, window_bounds = array<i64: 32, 1>}, {transform_indices = @transform_5, window_bounds = array<i64: 1, 32, 512>}]} {
    %c0 = arith.constant 0 : index
    %c0_0 = arith.constant 0 : index
    %c0_1 = arith.constant 0 : index
    %0 = vector.load %arg1[%c0, %c0_0, %c0_1] : memref<1x32x512xf32, #tpu.memory_space<vmem>>, vector<1x32x512xf32>
    %1 = vector.shape_cast %0 : vector<1x32x512xf32> to vector<32x512xf32>
    %cst = arith.constant dense<0.000000e+00> : vector<32xf32>
    %2 = vector.multi_reduction <add>, %1, %cst [1] : vector<32x512xf32> to vector<32xf32>
    %3 = vector.shape_cast %2 : vector<32xf32> to vector<32x1xf32>
    %cst_2 = arith.constant 0.001953125 : f32
    %4 = vector.broadcast %cst_2 : f32 to vector<32x1xf32>
    %5 = arith.mulf %3, %4 : vector<32x1xf32>
    %cst_3 = arith.constant dense<0xFF800000> : vector<32xf32>
    %6 = vector.multi_reduction <maximumf>, %1, %cst_3 [1] : vector<32x512xf32> to vector<32xf32>
    %7 = vector.shape_cast %6 : vector<32xf32> to vector<32x1xf32>
    %c0_4 = arith.constant 0 : index
    %c0_5 = arith.constant 0 : index
    %8 = vector.load %arg2[%c0_4, %c0_5] : memref<2x32xf32, #tpu.memory_space<vmem>>, vector<2x32xf32>
    %cst_6 = arith.constant dense<0.000000e+00> : vector<2x1xf32>
    %9 = tpu.matmul %8, %5, %cst_6 {dimension_numbers = #tpu.dot_dimension_numbers<[1], [0], [0], [1], [0, 0, 1, 1], [], []>} : vector<2x32xf32>, vector<32x1xf32>, vector<2x1xf32> -> vector<2x1xf32>
    %c0_7 = arith.constant 0 : index
    %c0_8 = arith.constant 0 : index
    %10 = vector.load %arg3[%c0_7, %c0_8] : memref<2x1xf32, #tpu.memory_space<vmem>>, vector<2x1xf32>
    %11 = arith.addf %9, %10 : vector<2x1xf32>
    %cst_9 = arith.constant 0.000000e+00 : f32
    %12 = vector.broadcast %cst_9 : f32 to vector<2x1xf32>
    %13 = arith.maximumf %11, %12 : vector<2x1xf32>
    %c0_10 = arith.constant 0 : index
    %c0_11 = arith.constant 0 : index
    %14 = vector.load %arg4[%c0_10, %c0_11] : memref<32x2xf32, #tpu.memory_space<vmem>>, vector<32x2xf32>
    %cst_12 = arith.constant dense<0.000000e+00> : vector<32x1xf32>
    %15 = tpu.matmul %14, %13, %cst_12 {dimension_numbers = #tpu.dot_dimension_numbers<[1], [0], [0], [1], [0, 0, 1, 1], [], []>} : vector<32x2xf32>, vector<2x1xf32>, vector<32x1xf32> -> vector<32x1xf32>
    %c0_13 = arith.constant 0 : index
    %c0_14 = arith.constant 0 : index
    %16 = vector.load %arg5[%c0_13, %c0_14] : memref<32x1xf32, #tpu.memory_space<vmem>>, vector<32x1xf32>
    %17 = arith.addf %15, %16 : vector<32x1xf32>
    %c0_15 = arith.constant 0 : index
    %c0_16 = arith.constant 0 : index
    %18 = vector.load %arg2[%c0_15, %c0_16] : memref<2x32xf32, #tpu.memory_space<vmem>>, vector<2x32xf32>
    %cst_17 = arith.constant dense<0.000000e+00> : vector<2x1xf32>
    %19 = tpu.matmul %18, %7, %cst_17 {dimension_numbers = #tpu.dot_dimension_numbers<[1], [0], [0], [1], [0, 0, 1, 1], [], []>} : vector<2x32xf32>, vector<32x1xf32>, vector<2x1xf32> -> vector<2x1xf32>
    %c0_18 = arith.constant 0 : index
    %c0_19 = arith.constant 0 : index
    %20 = vector.load %arg3[%c0_18, %c0_19] : memref<2x1xf32, #tpu.memory_space<vmem>>, vector<2x1xf32>
    %21 = arith.addf %19, %20 : vector<2x1xf32>
    %cst_20 = arith.constant 0.000000e+00 : f32
    %22 = vector.broadcast %cst_20 : f32 to vector<2x1xf32>
    %23 = arith.maximumf %21, %22 : vector<2x1xf32>
    %c0_21 = arith.constant 0 : index
    %c0_22 = arith.constant 0 : index
    %24 = vector.load %arg4[%c0_21, %c0_22] : memref<32x2xf32, #tpu.memory_space<vmem>>, vector<32x2xf32>
    %cst_23 = arith.constant dense<0.000000e+00> : vector<32x1xf32>
    %25 = tpu.matmul %24, %23, %cst_23 {dimension_numbers = #tpu.dot_dimension_numbers<[1], [0], [0], [1], [0, 0, 1, 1], [], []>} : vector<32x2xf32>, vector<2x1xf32>, vector<32x1xf32> -> vector<32x1xf32>
    %c0_24 = arith.constant 0 : index
    %c0_25 = arith.constant 0 : index
    %26 = vector.load %arg5[%c0_24, %c0_25] : memref<32x1xf32, #tpu.memory_space<vmem>>, vector<32x1xf32>
    %27 = arith.addf %25, %26 : vector<32x1xf32>
    %28 = arith.addf %17, %27 : vector<32x1xf32>
    %cst_26 = arith.constant 0.000000e+00 : f32
    %29 = vector.broadcast %cst_26 : f32 to vector<32x1xf32>
    %30 = arith.subf %29, %28 : vector<32x1xf32>
    %31 = math.exp %30 : vector<32x1xf32>
    %cst_27 = arith.constant 1.000000e+00 : f32
    %32 = vector.broadcast %cst_27 : f32 to vector<32x1xf32>
    %33 = arith.addf %32, %31 : vector<32x1xf32>
    %cst_28 = arith.constant 1.000000e+00 : f32
    %34 = vector.broadcast %cst_28 : f32 to vector<32x1xf32>
    %35 = arith.divf %34, %33 : vector<32x1xf32>
    %cst_29 = arith.constant 1.000000e+00 : f32
    %36 = vector.broadcast %cst_29 : f32 to vector<32x1xf32>
    %37 = arith.addf %36, %35 : vector<32x1xf32>
    %38 = vector.broadcast %37 : vector<32x1xf32> to vector<32x512xf32>
    %39 = arith.mulf %1, %38 : vector<32x512xf32>
    %c0_30 = arith.constant 0 : index
    %c0_31 = arith.constant 0 : index
    %c0_32 = arith.constant 0 : index
    %40 = vector.load %arg6[%c0_30, %c0_31, %c0_32] : memref<1x32x512xf32, #tpu.memory_space<vmem>>, vector<1x32x512xf32>
    %41 = vector.shape_cast %40 : vector<1x32x512xf32> to vector<32x512xf32>
    %42 = vector.shape_cast %39 : vector<32x512xf32> to vector<1x32x512xf32>
    tpu.vector_store %arg6[%c0_30, %c0_31, %c0_32], %42 {strides = array<i32>} : memref<1x32x512xf32, #tpu.memory_space<vmem>>, vector<1x32x512xf32>,
    return
  }
  func.func @transform_0(%arg0: i32) -> (i32, i32, i32) {
    %c0_i32 = arith.constant 0 : i32
    %c0_i32_0 = arith.constant 0 : i32
    %c0_i32_1 = arith.constant 0 : i32
    return %arg0, %c0_i32, %c0_i32_0 : i32, i32, i32
  }
  func.func @transform_1(%arg0: i32) -> (i32, i32) {
    %c0_i32 = arith.constant 0 : i32
    %c0_i32_0 = arith.constant 0 : i32
    %c0_i32_1 = arith.constant 0 : i32
    return %c0_i32, %c0_i32_0 : i32, i32
  }
  func.func @transform_2(%arg0: i32) -> (i32, i32) {
    %c0_i32 = arith.constant 0 : i32
    %c0_i32_0 = arith.constant 0 : i32
    %c0_i32_1 = arith.constant 0 : i32
    return %c0_i32, %c0_i32_0 : i32, i32
  }
  func.func @transform_3(%arg0: i32) -> (i32, i32) {
    %c0_i32 = arith.constant 0 : i32
    %c0_i32_0 = arith.constant 0 : i32
    %c0_i32_1 = arith.constant 0 : i32
    return %c0_i32, %c0_i32_0 : i32, i32
  }
  func.func @transform_4(%arg0: i32) -> (i32, i32) {
    %c0_i32 = arith.constant 0 : i32
    %c0_i32_0 = arith.constant 0 : i32
    %c0_i32_1 = arith.constant 0 : i32
    return %c0_i32, %c0_i32_0 : i32, i32
  }
  func.func @transform_5(%arg0: i32) -> (i32, i32, i32) {
    %c0_i32 = arith.constant 0 : i32
    %c0_i32_0 = arith.constant 0 : i32
    %c0_i32_1 = arith.constant 0 : i32
    return %arg0, %c0_i32, %c0_i32_0 : i32, i32, i32
  }
}

</mosaic_0001>

<llo_original>
// kernel: res_block.1
$region0: #{res_block.1}
  #allocation0 [shape = 'u32[]', space=smem, size = 0x4, offset = 0x4, fixed_abs, tag = 'smem constant byte address 0x4 - core index']
  #allocation1 [shape = 'u32[144,128]{1,0:T(1,128)}', space=vmem, size = 0x12000, scoped, tag = 'internal scratch']
  %s0 = inlined_call_operand.vmem [shape: f32[2,32,512], index: 0, kind: input, shape index: {}]
  %s1 = inlined_call_operand.vmem [shape: f32[2,32], index: 1, kind: input, shape index: {}]
  %s2 = inlined_call_operand.vmem [shape: f32[2,1], index: 2, kind: input, shape index: {}]
  %s3 = inlined_call_operand.vmem [shape: f32[32,2], index: 3, kind: input, shape index: {}]
  %s4 = inlined_call_operand.vmem [shape: f32[32,1], index: 4, kind: input, shape index: {}]
  %s5 = inlined_call_operand.vmem [shape: f32[2,32,512], index: 5, kind: output, shape index: {}]
  %s6 = sld [smem:[#allocation0]]
  $region53: #{res_block.1} parent=0
    _
  %s8 = ssub.s32 1, %s6
  %s9 = scalar_select 0, %s8, %s6
  loop: start=0, step=1, limit=4
  $region2: #{res_block.1} parent=0 // loop_pre_header
    _
  $region3: #{res_block.1} parent=0 // loop_header
    %s11 = sphi 0, %s15
    %p12 = scmp.ge.s32.totalorder %s11, 4
    %s21 = sphi 0, %s23
    %s24 = sphi 0, %s21
    %s25 = sphi 0, %s24
    %s41 = sphi 0, %s25
    %s45 = sphi 0, %s45
    %s47 = sphi 0, %s45
    %s48 = sphi 0, %s47
    %s62 = sphi 0, %s48
    %s66 = sphi 0, %s66
    %s68 = sphi 0, %s66
    %s69 = sphi 0, %s68
    %s83 = sphi 0, %s69
    %s87 = sphi 0, %s87
    %s89 = sphi 0, %s87
    %s90 = sphi 0, %s89
    %s104 = sphi 0, %s90
    %s108 = sphi 0, %s108
    %s110 = sphi 0, %s108
    %s111 = sphi 0, %s110
    %s125 = sphi 0, %s111
    %s131 = sphi 0, %s133
    %s134 = sphi 0, %s131
    %s135 = sphi 0, %s134
    %s151 = sphi 0, %s135
  $region4: #{res_block.1} parent=0 // loop_header_branch
    %14 = sbr.rel (%p12) target = $region8
  $region5: #{res_block.1} parent=0 // loop_body
    %s16 = ssub.s32 %s11, 1
    %s17 = ssub.s32 %s11, 2
    %s18 = sadd.s32 %s11, 1
    %s19 = ssub.s32 %s11, %s18
    %p20 = scmp.eq.s32.totalorder %s19, 0
    %s22 = sadd.s32 %s21, 1
    %s23 = scalar_select %p20, %s21, %s22
    %p26 = pneg %p20
    %p27 = scmp.eq.s32.totalorder %s11, 1
    %p28 = por %p26, %p27
    %p29 = scmp.ne.s32.totalorder %s21, %s24
    %p30 = scmp.eq.s32.totalorder %s11, 0
    %p31 = por %p29, %p30
    %p32 = scmp.ne.s32.totalorder %s21, %s24
    %p33 = scmp.eq.s32.totalorder %s16, 1
    %p34 = por %p32, %p33
    %p35 = scmp.ne.s32.totalorder %s24, %s25
    %p36 = scmp.eq.s32.totalorder %s16, 0
    %p37 = por %p35, %p36
    %p38 = scmp.ne.s32.totalorder %s24, %s25
    %p39 = scmp.eq.s32.totalorder %s17, 1
    %p40 = por %p38, %p39
    %p42 = scmp.ne.s32.totalorder %s25, %s41
    %p43 = scmp.eq.s32.totalorder %s17, 0
    %p44 = por %p42, %p43
    %s46 = sadd.s32 %s45, 1
    %p49 = scmp.eq.s32.totalorder %s11, 1
    %p50 = scmp.ne.s32.totalorder %s45, %s47
    %p51 = scmp.eq.s32.totalorder %s11, 0
    %p52 = por %p50, %p51
    %p53 = scmp.ne.s32.totalorder %s45, %s47
    %p54 = scmp.eq.s32.totalorder %s16, 1
    %p55 = por %p53, %p54
    %p56 = scmp.ne.s32.totalorder %s47, %s48
    %p57 = scmp.eq.s32.totalorder %s16, 0
    %p58 = por %p56, %p57
    %p59 = scmp.ne.s32.totalorder %s47, %s48
    %p60 = scmp.eq.s32.totalorder %s17, 1
    %p61 = por %p59, %p60
    %p63 = scmp.ne.s32.totalorder %s48, %s62
    %p64 = scmp.eq.s32.totalorder %s17, 0
    %p65 = por %p63, %p64
    %s67 = sadd.s32 %s66, 1
    %p70 = scmp.eq.s32.totalorder %s11, 1
    %p71 = scmp.ne.s32.totalorder %s66, %s68
    %p72 = scmp.eq.s32.totalorder %s11, 0
    %p73 = por %p71, %p72
    %p74 = scmp.ne.s32.totalorder %s66, %s68
    %p75 = scmp.eq.s32.totalorder %s16, 1
    %p76 = por %p74, %p75
    %p77 = scmp.ne.s32.totalorder %s68, %s69
    %p78 = scmp.eq.s32.totalorder %s16, 0
    %p79 = por %p77, %p78
    %p80 = scmp.ne.s32.totalorder %s68, %s69
    %p81 = scmp.eq.s32.totalorder %s17, 1
    %p82 = por %p80, %p81
    %p84 = scmp.ne.s32.totalorder %s69, %s83
    %p85 = scmp.eq.s32.totalorder %s17, 0
    %p86 = por %p84, %p85
    %s88 = sadd.s32 %s87, 1
    %p91 = scmp.eq.s32.totalorder %s11, 1
    %p92 = scmp.ne.s32.totalorder %s87, %s89
    %p93 = scmp.eq.s32.totalorder %s11, 0
    %p94 = por %p92, %p93
    %p95 = scmp.ne.s32.totalorder %s87, %s89
    %p96 = scmp.eq.s32.totalorder %s16, 1
    %p97 = por %p95, %p96
    %p98 = scmp.ne.s32.totalorder %s89, %s90
    %p99 = scmp.eq.s32.totalorder %s16, 0
    %p100 = por %p98, %p99
    %p101 = scmp.ne.s32.totalorder %s89, %s90
    %p102 = scmp.eq.s32.totalorder %s17, 1
    %p103 = por %p101, %p102
    %p105 = scmp.ne.s32.totalorder %s90, %s104
    %p106 = scmp.eq.s32.totalorder %s17, 0
    %p107 = por %p105, %p106
    %s109 = sadd.s32 %s108, 1
    %p112 = scmp.eq.s32.totalorder %s11, 1
    %p113 = scmp.ne.s32.totalorder %s108, %s110
    %p114 = scmp.eq.s32.totalorder %s11, 0
    %p115 = por %p113, %p114
    %p116 = scmp.ne.s32.totalorder %s108, %s110
    %p117 = scmp.eq.s32.totalorder %s16, 1
    %p118 = por %p116, %p117
    %p119 = scmp.ne.s32.totalorder %s110, %s111
    %p120 = scmp.eq.s32.totalorder %s16, 0
    %p121 = por %p119, %p120
    %p122 = scmp.ne.s32.totalorder %s110, %s111
    %p123 = scmp.eq.s32.totalorder %s17, 1
    %p124 = por %p122, %p123
    %p126 = scmp.ne.s32.totalorder %s111, %s125
    %p127 = scmp.eq.s32.totalorder %s17, 0
    %p128 = por %p126, %p127
    %s129 = ssub.s32 %s11, %s18
    %p130 = scmp.eq.s32.totalorder %s129, 0
    %s132 = sadd.s32 %s131, 1
    %s133 = scalar_select %p130, %s131, %s132
    %p136 = pneg %p130
    %p137 = scmp.eq.s32.totalorder %s11, 1
    %p138 = por %p136, %p137
    %p139 = scmp.ne.s32.totalorder %s131, %s134
    %p140 = scmp.eq.s32.totalorder %s11, 0
    %p141 = por %p139, %p140
    %p142 = scmp.ne.s32.totalorder %s131, %s134
    %p143 = scmp.eq.s32.totalorder %s16, 1
    %p144 = por %p142, %p143
    %p145 = scmp.ne.s32.totalorder %s134, %s135
    %p146 = scmp.eq.s32.totalorder %s16, 0
    %p147 = por %p145, %p146
    %p148 = scmp.ne.s32.totalorder %s134, %s135
    %p149 = scmp.eq.s32.totalorder %s17, 1
    %p150 = por %p148, %p149
    %p152 = scmp.ne.s32.totalorder %s135, %s151
    %p153 = scmp.eq.s32.totalorder %s17, 0
    %p154 = por %p152, %p153
    %p155 = scmp.le.s32.totalorder 1, %s11
    %p156 = scmp.lt.s32.totalorder %s11, 3
    %p157 = pnand %p155, %p156
    %p158 = pneg %p157
    // Predicated region
    $region9: #{res_block.1} parent=5 // pred_check
      _
    $region10: #{res_block.1} parent=5 // pred_check_branch
      %160 = sbr.rel (%p157) target = $region12
    $region11: #{res_block.1} parent=5 // pred_region
      %s161 = ssub.s32 %s11, 1
      // Predicated region
      $region13: #{res_block.1} parent=11 // pred_check
        %p162 = pneg %p58
      $region14: #{res_block.1} parent=11 // pred_check_branch
        %164 = sbr.rel (%p162) target = $region16
      $region15: #{res_block.1} parent=11 // pred_region
        _
      $region16: #{res_block.1} parent=11 // pred_fallthru
        _
      // Predicated region
      $region17: #{res_block.1} parent=11 // pred_check
        %p165 = pneg %p79
      $region18: #{res_block.1} parent=11 // pred_check_branch
        %167 = sbr.rel (%p165) target = $region20
      $region19: #{res_block.1} parent=11 // pred_region
        _
      $region20: #{res_block.1} parent=11 // pred_fallthru
        _
      // Predicated region
      $region21: #{res_block.1} parent=11 // pred_check
        %p168 = pneg %p100
      $region22: #{res_block.1} parent=11 // pred_check_branch
        %170 = sbr.rel (%p168) target = $region24
      $region23: #{res_block.1} parent=11 // pred_region
        _
      $region24: #{res_block.1} parent=11 // pred_fallthru
        _
      // Predicated region
      $region25: #{res_block.1} parent=11 // pred_check
        %p171 = pneg %p121
      $region26: #{res_block.1} parent=11 // pred_check_branch
        %173 = sbr.rel (%p171) target = $region28
      $region27: #{res_block.1} parent=11 // pred_region
        _
      $region28: #{res_block.1} parent=11 // pred_fallthru
        _
    $region12: #{res_block.1} parent=5 // pred_fallthru
      _
    %p174 = scmp.lt.s32.totalorder %s11, 2
    // Predicated region
    $region29: #{res_block.1} parent=5 // pred_check
      %p175 = pneg %p174
    $region30: #{res_block.1} parent=5 // pred_check_branch
      %177 = sbr.rel (%p175) target = $region32
    $region31: #{res_block.1} parent=5 // pred_region
      // Predicated region
      $region33: #{res_block.1} parent=31 // pred_check
        %p178 = pneg %p31
      $region34: #{res_block.1} parent=31 // pred_check_branch
        %180 = sbr.rel (%p178) target = $region36
      $region35: #{res_block.1} parent=31 // pred_region
        %p181 = scmp.lt.s32.totalorder %s11, 1
        %s182 = scalar_select %p181, %s11, 1
        %s183 = smul.addr %s182, 16
        %s184 = smul.addr %s183, 8
        %s185 = scalar_lea.vmem %s0, %s184
      $region36: #{res_block.1} parent=31 // pred_fallthru
        _
    $region32: #{res_block.1} parent=5 // pred_fallthru
      _
    %p186 = scmp.le.s32.totalorder 1, %s11
    %p187 = scmp.lt.s32.totalorder %s11, 3
    %p188 = pnand %p186, %p187
    %p189 = pneg %p188
    // Predicated region
    $region37: #{res_block.1} parent=5 // pred_check
      _
    $region38: #{res_block.1} parent=5 // pred_check_branch
      %191 = sbr.rel (%p188) target = $region40
    $region39: #{res_block.1} parent=5 // pred_region
      %s192 = ssub.s32 %s11, 1
      %p193 = scmp.lt.s32.totalorder %s16, 1
      %s194 = scalar_select %p193, %s16, 1
      %s195 = smul.addr %s194, 16
      %s196 = smul.addr %s195, 8
      %s197 = scalar_lea.vmem %s0, %s196
      %p198 = pneg %p37
      %p199 = pneg %p34
      %p200 = pneg %p58
      %p201 = pneg %p55
      %p202 = pneg %p79
      %p203 = pneg %p76
      %p204 = pneg %p100
      %p205 = pneg %p97
      %p206 = pneg %p121
      %p207 = pneg %p118
      %p208 = pneg %p147
      %p209 = pneg %p144
      %p210 = scmp.lt.s32.totalorder %s16, 1
      %s211 = scalar_select %p210, %s16, 1
      %s212 = smul.addr %s211, 16
      %s213 = smul.addr %s212, 8
      %s214 = scalar_lea.vmem %s5, %s213
      %p215 = scmp.lt.s32.totalorder %s16, 1
      %s216 = scalar_select %p215, %s16, 1
      %s217 = smul.addr %s216, 16
      %s218 = smul.addr %s217, 8
      %s219 = scalar_lea.vmem %s0, %s218
      %p220 = scmp.lt.s32.totalorder %s16, 1
      %s221 = scalar_select %p220, %s16, 1
      %s222 = smul.addr %s221, 16
      %s223 = smul.addr %s222, 8
      %s224 = scalar_lea.vmem %s5, %s223
      %v225 = vld [vmem:[%s219] sm:$0xff]
      %v226 = vld [vmem:[%s219 + $0x8] sm:$0xff]
      %v227 = vld [vmem:[%s219 + $0x10] sm:$0xff]
      %v228 = vld [vmem:[%s219 + $0x18] sm:$0xff]
      %v229 = vld [vmem:[%s219 + $0x20] sm:$0xff]
      %v230 = vld [vmem:[%s219 + $0x28] sm:$0xff]
      %v231 = vld [vmem:[%s219 + $0x30] sm:$0xff]
      %v232 = vld [vmem:[%s219 + $0x38] sm:$0xff]
      %v233 = vld [vmem:[%s219 + $0x40] sm:$0xff]
      %v234 = vld [vmem:[%s219 + $0x48] sm:$0xff]
      %v235 = vld [vmem:[%s219 + $0x50] sm:$0xff]
      %v236 = vld [vmem:[%s219 + $0x58] sm:$0xff]
      %v237 = vld [vmem:[%s219 + $0x60] sm:$0xff]
      %v238 = vld [vmem:[%s219 + $0x68] sm:$0xff]
      %v239 = vld [vmem:[%s219 + $0x70] sm:$0xff]
      %v240 = vld [vmem:[%s219 + $0x78] sm:$0xff]
      %v241 = vadd.f32 %v225, %v226
      %v242 = vadd.f32 %v241, %v227
      %v243 = vadd.f32 %v242, %v228
      %244 = vadd.xlane.f32.xlu0 %v243
      %v245 = vpop.xlane.xlu0 %244
      %v246 = vadd.f32 %v229, %v230
      %v247 = vadd.f32 %v246, %v231
      %v248 = vadd.f32 %v247, %v232
      %249 = vadd.xlane.f32.xlu0 %v248
      %v250 = vpop.xlane.xlu0 %249
      %v251 = vadd.f32 %v233, %v234
      %v252 = vadd.f32 %v251, %v235
      %v253 = vadd.f32 %v252, %v236
      %254 = vadd.xlane.f32.xlu0 %v253
      %v255 = vpop.xlane.xlu0 %254
      %v256 = vadd.f32 %v237, %v238
      %v257 = vadd.f32 %v256, %v239
      %v258 = vadd.f32 %v257, %v240
      %259 = vadd.xlane.f32.xlu0 %v258
      %v260 = vpop.xlane.xlu0 %259
      %v261 = vmul.f32 %v245, 0.001953125
      %v262 = vmul.f32 %v250, 0.001953125
      %v263 = vmul.f32 %v255, 0.001953125
      %v264 = vmul.f32 %v260, 0.001953125
      %v265 = vmax.f32 %v225, %v226
      %v266 = vmax.f32 %v265, %v227
      %v267 = vmax.f32 %v266, %v228
      %268 = vmax.xlane.f32.xlu0 %v267
      %v269 = vpop.xlane.xlu0 %268
      %v270 = vmax.f32 %v229, %v230
      %v271 = vmax.f32 %v270, %v231
      %v272 = vmax.f32 %v271, %v232
      %273 = vmax.xlane.f32.xlu0 %v272
      %v274 = vpop.xlane.xlu0 %273
      %v275 = vmax.f32 %v233, %v234
      %v276 = vmax.f32 %v275, %v235
      %v277 = vmax.f32 %v276, %v236
      %278 = vmax.xlane.f32.xlu0 %v277
      %v279 = vpop.xlane.xlu0 %278
      %v280 = vmax.f32 %v237, %v238
      %v281 = vmax.f32 %v280, %v239
      %v282 = vmax.f32 %v281, %v240
      %283 = vmax.xlane.f32.xlu0 %v282
      %v284 = vpop.xlane.xlu0 %283
      %v285 = vld [vmem:[%s1] sm:$0x3]
      %v286 = vld [vmem:[%s2] sm:$0x3]
      %vm287 = vcmask 261120
      %v289 = vsel %vm287, %v285, 0
      %291 = vmatprep.subr.mxu0 0.0
      %292 = vmatpush1.msra.mxu0 %v261
      %293 = vmatprep.subr.mxu0 0.0
      %294 = vmatpush1.msra.mxu0 %v262
      %295 = vmatprep.subr.mxu0 0.0
      %296 = vmatpush1.msra.mxu0 %v263
      %297 = vmatprep.subr.mxu0 0.0
      %298 = vmatpush1.msra.mxu0 %v264
      %299 = vmatprep.subr.mxu0 0.0
      %300 = vmatpush1.msra.mxu0 0.0
      %301 = vmatprep.subr.mxu0 0.0
      %302 = vmatpush1.msra.mxu0 0.0
      %303 = vmatprep.subr.mxu0 0.0
      %304 = vmatpush1.msra.mxu0 0.0
      %305 = vmatprep.subr.mxu0 0.0
      %306 = vmatpush1.msra.mxu0 0.0
      %307 = vmatprep.subr.mxu0 0.0
      %308 = vmatpush1.msra.mxu0 0.0
      %309 = vmatprep.subr.mxu0 0.0
      %310 = vmatpush1.msra.mxu0 0.0
      %311 = vmatprep.subr.mxu0 0.0
      %312 = vmatpush1.msra.mxu0 0.0
      %313 = vmatprep.subr.mxu0 0.0
      %314 = vmatpush1.msra.mxu0 0.0
      %315 = vmatprep.subr.mxu0 0.0
      %316 = vmatpush1.msra.mxu0 0.0
      %317 = vmatprep.subr.mxu0 0.0
      %318 = vmatpush1.msra.mxu0 0.0
      %319 = vmatprep.subr.mxu0 0.0
      %320 = vmatpush1.msra.mxu0 0.0
      %321 = vmatprep.subr.mxu0 0.0
      %322 = vmatpush1.msra.mxu0 0.0
      %323 = vmatprep.subr.mxu0 0.0
      %324 = vmatpush1.msra.mxu0 0.0
      %325 = vmatprep.subr.mxu0 0.0
      %326 = vmatpush1.msra.mxu0 0.0
      %327 = vmatprep.subr.mxu0 0.0
      %328 = vmatpush1.msra.mxu0 0.0
      %329 = vmatprep.subr.mxu0 0.0
      %330 = vmatpush1.msra.mxu0 0.0
      %331 = vmatprep.subr.mxu0 0.0
      %332 = vmatpush1.msra.mxu0 0.0
      %333 = vmatprep.subr.mxu0 0.0
      %334 = vmatpush1.msra.mxu0 0.0
      %335 = vmatprep.subr.mxu0 0.0
      %336 = vmatpush1.msra.mxu0 0.0
      %337 = vmatprep.subr.mxu0 0.0
      %338 = vmatpush1.msra.mxu0 0.0
      %339 = vmatprep.subr.mxu0 0.0
      %340 = vmatpush1.msra.mxu0 0.0
      %341 = vmatprep.subr.mxu0 0.0
      %342 = vmatpush1.msra.mxu0 0.0
      %343 = vmatprep.subr.mxu0 0.0
      %344 = vmatpush1.msra.mxu0 0.0
      %345 = vmatprep.subr.mxu0 0.0
      %346 = vmatpush1.msra.mxu0 0.0
      %347 = vmatprep.subr.mxu0 0.0
      %348 = vmatpush1.msra.mxu0 0.0
      %349 = vmatprep.subr.mxu0 0.0
      %350 = vmatpush1.msra.mxu0 0.0
      %351 = vmatprep.subr.mxu0 0.0
      %352 = vmatpush1.msra.mxu0 0.0
      %353 = vmatprep.subr.mxu0 0.0
      %354 = vmatpush1.msra.mxu0 0.0
      %355 = vmatprep.mubr.f32.mxu0 0.0
      %356 = vmatmul.mubr.f32.gmra.mrb[0].mxu0 %v289
      %v357 = vpop.f32.mrb[0].mxu0
      %v358 = vadd.f32 %v286, %v357
      %v359 = vpop.f32.mrb[0].mxu0
      %360 = vdwg.mxu0
      %v361 = vmax.f32 %v358, 0.0
      %v362 = vld [vmem:[%s3] sm:$0xff]
      %v363 = vld [vmem:[%s3 + $0x8] sm:$0xff]
      %v364 = vld [vmem:[%s3 + $0x10] sm:$0xff]
      %v365 = vld [vmem:[%s3 + $0x18] sm:$0xff]
      %v366 = vld [vmem:[%s4] sm:$0xff]
      %v367 = vld [vmem:[%s4 + $0x8] sm:$0xff]
      %v368 = vld [vmem:[%s4 + $0x10] sm:$0xff]
      %v369 = vld [vmem:[%s4 + $0x18] sm:$0xff]
      %vm370 = vcmask 15360
      %v372 = vsel %vm370, %v362, 0
      %v375 = vsel %vm370, %v363, 0
      %v378 = vsel %vm370, %v364, 0
      %v381 = vsel %vm370, %v365, 0
      %vm383 = vcmask 1041408
      %v385 = vsel %vm383, %v361, 0
      %387 = vmatprep.subr.mxu0 0.0
      %388 = vmatpush1.msra.mxu0 %v385
      %389 = vmatprep.subr.mxu0 0.0
      %390 = vmatpush1.msra.mxu0 0.0
      %391 = vmatprep.subr.mxu0 0.0
      %392 = vmatpush1.msra.mxu0 0.0
      %393 = vmatprep.subr.mxu0 0.0
      %394 = vmatpush1.msra.mxu0 0.0
      %395 = vmatprep.subr.mxu0 0.0
      %396 = vmatpush1.msra.mxu0 0.0
      %397 = vmatprep.subr.mxu0 0.0
      %398 = vmatpush1.msra.mxu0 0.0
      %399 = vmatprep.subr.mxu0 0.0
      %400 = vmatpush1.msra.mxu0 0.0
      %401 = vmatprep.subr.mxu0 0.0
      %402 = vmatpush1.msra.mxu0 0.0
      %403 = vmatprep.subr.mxu0 0.0
      %404 = vmatpush1.msra.mxu0 0.0
      %405 = vmatprep.subr.mxu0 0.0
      %406 = vmatpush1.msra.mxu0 0.0
      %407 = vmatprep.subr.mxu0 0.0
      %408 = vmatpush1.msra.mxu0 0.0
      %409 = vmatprep.subr.mxu0 0.0
      %410 = vmatpush1.msra.mxu0 0.0
      %411 = vmatprep.subr.mxu0 0.0
      %412 = vmatpush1.msra.mxu0 0.0
      %413 = vmatprep.subr.mxu0 0.0
      %414 = vmatpush1.msra.mxu0 0.0
      %415 = vmatprep.subr.mxu0 0.0
      %416 = vmatpush1.msra.mxu0 0.0
      %417 = vmatprep.subr.mxu0 0.0
      %418 = vmatpush1.msra.mxu0 0.0
      %419 = vmatprep.subr.mxu0 0.0
      %420 = vmatpush1.msra.mxu0 0.0
      %421 = vmatprep.subr.mxu0 0.0
      %422 = vmatpush1.msra.mxu0 0.0
      %423 = vmatprep.subr.mxu0 0.0
      %424 = vmatpush1.msra.mxu0 0.0
      %425 = vmatprep.subr.mxu0 0.0
      %426 = vmatpush1.msra.mxu0 0.0
      %427 = vmatprep.subr.mxu0 0.0
      %428 = vmatpush1.msra.mxu0 0.0
      %429 = vmatprep.subr.mxu0 0.0
      %430 = vmatpush1.msra.mxu0 0.0
      %431 = vmatprep.subr.mxu0 0.0
      %432 = vmatpush1.msra.mxu0 0.0
      %433 = vmatprep.subr.mxu0 0.0
      %434 = vmatpush1.msra.mxu0 0.0
      %435 = vmatprep.subr.mxu0 0.0
      %436 = vmatpush1.msra.mxu0 0.0
      %437 = vmatprep.subr.mxu0 0.0
      %438 = vmatpush1.msra.mxu0 0.0
      %439 = vmatprep.subr.mxu0 0.0
      %440 = vmatpush1.msra.mxu0 0.0
      %441 = vmatprep.subr.mxu0 0.0
      %442 = vmatpush1.msra.mxu0 0.0
      %443 = vmatprep.subr.mxu0 0.0
      %444 = vmatpush1.msra.mxu0 0.0
      %445 = vmatprep.subr.mxu0 0.0
      %446 = vmatpush1.msra.mxu0 0.0
      %447 = vmatprep.subr.mxu0 0.0
      %448 = vmatpush1.msra.mxu0 0.0
      %449 = vmatprep.subr.mxu0 0.0
      %450 = vmatpush1.msra.mxu0 0.0
      %451 = vmatprep.mubr.f32.mxu0 0.0
      %452 = vmatmul.mubr.f32.gmra.mrb[0].mxu0 %v372
      %v453 = vpop.f32.mrb[0].mxu0
      %v454 = vadd.f32 %v366, %v453
      %v455 = vpop.f32.mrb[0].mxu0
      %456 = vmatprep.mubr.f32.mxu0 0.0
      %457 = vmatmul.mubr.f32.gmra.mrb[0].mxu0 %v375
      %v458 = vpop.f32.mrb[0].mxu0
      %v459 = vadd.f32 %v367, %v458
      %v460 = vpop.f32.mrb[0].mxu0
      %461 = vmatprep.mubr.f32.mxu0 0.0
      %462 = vmatmul.mubr.f32.gmra.mrb[0].mxu0 %v378
      %v463 = vpop.f32.mrb[0].mxu0
      %v464 = vadd.f32 %v368, %v463
      %v465 = vpop.f32.mrb[0].mxu0
      %466 = vmatprep.mubr.f32.mxu0 0.0
      %467 = vmatmul.mubr.f32.gmra.mrb[0].mxu0 %v381
      %v468 = vpop.f32.mrb[0].mxu0
      %v469 = vadd.f32 %v369, %v468
      %v470 = vpop.f32.mrb[0].mxu0
      %471 = vdwg.mxu0
      %472 = vmatprep.subr.mxu0 0.0
      %473 = vmatpush1.msra.mxu0 %v269
      %474 = vmatprep.subr.mxu0 0.0
      %475 = vmatpush1.msra.mxu0 %v274
      %476 = vmatprep.subr.mxu0 0.0
      %477 = vmatpush1.msra.mxu0 %v279
      %478 = vmatprep.subr.mxu0 0.0
      %479 = vmatpush1.msra.mxu0 %v284
      %480 = vmatprep.subr.mxu0 0.0
      %481 = vmatpush1.msra.mxu0 0.0
      %482 = vmatprep.subr.mxu0 0.0
      %483 = vmatpush1.msra.mxu0 0.0
      %484 = vmatprep.subr.mxu0 0.0
      %485 = vmatpush1.msra.mxu0 0.0
      %486 = vmatprep.subr.mxu0 0.0
      %487 = vmatpush1.msra.mxu0 0.0
      %488 = vmatprep.subr.mxu0 0.0
      %489 = vmatpush1.msra.mxu0 0.0
      %490 = vmatprep.subr.mxu0 0.0
      %491 = vmatpush1.msra.mxu0 0.0
      %492 = vmatprep.subr.mxu0 0.0
      %493 = vmatpush1.msra.mxu0 0.0
      %494 = vmatprep.subr.mxu0 0.0
      %495 = vmatpush1.msra.mxu0 0.0
      %496 = vmatprep.subr.mxu0 0.0
      %497 = vmatpush1.msra.mxu0 0.0
      %498 = vmatprep.subr.mxu0 0.0
      %499 = vmatpush1.msra.mxu0 0.0
      %500 = vmatprep.subr.mxu0 0.0
      %501 = vmatpush1.msra.mxu0 0.0
      %502 = vmatprep.subr.mxu0 0.0
      %503 = vmatpush1.msra.mxu0 0.0
      %504 = vmatprep.subr.mxu0 0.0
      %505 = vmatpush1.msra.mxu0 0.0
      %506 = vmatprep.subr.mxu0 0.0
      %507 = vmatpush1.msra.mxu0 0.0
      %508 = vmatprep.subr.mxu0 0.0
      %509 = vmatpush1.msra.mxu0 0.0
      %510 = vmatprep.subr.mxu0 0.0
      %511 = vmatpush1.msra.mxu0 0.0
      %512 = vmatprep.subr.mxu0 0.0
      %513 = vmatpush1.msra.mxu0 0.0
      %514 = vmatprep.subr.mxu0 0.0
      %515 = vmatpush1.msra.mxu0 0.0
      %516 = vmatprep.subr.mxu0 0.0
      %517 = vmatpush1.msra.mxu0 0.0
      %518 = vmatprep.subr.mxu0 0.0
      %519 = vmatpush1.msra.mxu0 0.0
      %520 = vmatprep.subr.mxu0 0.0
      %521 = vmatpush1.msra.mxu0 0.0
      %522 = vmatprep.subr.mxu0 0.0
      %523 = vmatpush1.msra.mxu0 0.0
      %524 = vmatprep.subr.mxu0 0.0
      %525 = vmatpush1.msra.mxu0 0.0
      %526 = vmatprep.subr.mxu0 0.0
      %527 = vmatpush1.msra.mxu0 0.0
      %528 = vmatprep.subr.mxu0 0.0
      %529 = vmatpush1.msra.mxu0 0.0
      %530 = vmatprep.subr.mxu0 0.0
      %531 = vmatpush1.msra.mxu0 0.0
      %532 = vmatprep.subr.mxu0 0.0
      %533 = vmatpush1.msra.mxu0 0.0
      %534 = vmatprep.subr.mxu0 0.0
      %535 = vmatpush1.msra.mxu0 0.0
      %536 = vmatprep.mubr.f32.mxu0 0.0
      %537 = vmatmul.mubr.f32.gmra.mrb[0].mxu0 %v289
      %v538 = vpop.f32.mrb[0].mxu0
      %v539 = vadd.f32 %v286, %v538
      %v540 = vpop.f32.mrb[0].mxu0
      %541 = vdwg.mxu0
      %v542 = vmax.f32 %v539, 0.0
      %v544 = vsel %vm383, %v542, 0
      %546 = vmatprep.subr.mxu0 0.0
      %547 = vmatpush1.msra.mxu0 %v544
      %548 = vmatprep.subr.mxu0 0.0
      %549 = vmatpush1.msra.mxu0 0.0
      %550 = vmatprep.subr.mxu0 0.0
      %551 = vmatpush1.msra.mxu0 0.0
      %552 = vmatprep.subr.mxu0 0.0
      %553 = vmatpush1.msra.mxu0 0.0
      %554 = vmatprep.subr.mxu0 0.0
      %555 = vmatpush1.msra.mxu0 0.0
      %556 = vmatprep.subr.mxu0 0.0
      %557 = vmatpush1.msra.mxu0 0.0
      %558 = vmatprep.subr.mxu0 0.0
      %559 = vmatpush1.msra.mxu0 0.0
      %560 = vmatprep.subr.mxu0 0.0
      %561 = vmatpush1.msra.mxu0 0.0
      %562 = vmatprep.subr.mxu0 0.0
      %563 = vmatpush1.msra.mxu0 0.0
      %564 = vmatprep.subr.mxu0 0.0
      %565 = vmatpush1.msra.mxu0 0.0
      %566 = vmatprep.subr.mxu0 0.0
      %567 = vmatpush1.msra.mxu0 0.0
      %568 = vmatprep.subr.mxu0 0.0
      %569 = vmatpush1.msra.mxu0 0.0
      %570 = vmatprep.subr.mxu0 0.0
      %571 = vmatpush1.msra.mxu0 0.0
      %572 = vmatprep.subr.mxu0 0.0
      %573 = vmatpush1.msra.mxu0 0.0
      %574 = vmatprep.subr.mxu0 0.0
      %575 = vmatpush1.msra.mxu0 0.0
      %576 = vmatprep.subr.mxu0 0.0
      %577 = vmatpush1.msra.mxu0 0.0
      %578 = vmatprep.subr.mxu0 0.0
      %579 = vmatpush1.msra.mxu0 0.0
      %580 = vmatprep.subr.mxu0 0.0
      %581 = vmatpush1.msra.mxu0 0.0
      %582 = vmatprep.subr.mxu0 0.0
      %583 = vmatpush1.msra.mxu0 0.0
      %584 = vmatprep.subr.mxu0 0.0
      %585 = vmatpush1.msra.mxu0 0.0
      %586 = vmatprep.subr.mxu0 0.0
      %587 = vmatpush1.msra.mxu0 0.0
      %588 = vmatprep.subr.mxu0 0.0
      %589 = vmatpush1.msra.mxu0 0.0
      %590 = vmatprep.subr.mxu0 0.0
      %591 = vmatpush1.msra.mxu0 0.0
      %592 = vmatprep.subr.mxu0 0.0
      %593 = vmatpush1.msra.mxu0 0.0
      %594 = vmatprep.subr.mxu0 0.0
      %595 = vmatpush1.msra.mxu0 0.0
      %596 = vmatprep.subr.mxu0 0.0
      %597 = vmatpush1.msra.mxu0 0.0
      %598 = vmatprep.subr.mxu0 0.0
      %599 = vmatpush1.msra.mxu0 0.0
      %600 = vmatprep.subr.mxu0 0.0
      %601 = vmatpush1.msra.mxu0 0.0
      %602 = vmatprep.subr.mxu0 0.0
      %603 = vmatpush1.msra.mxu0 0.0
      %604 = vmatprep.subr.mxu0 0.0
      %605 = vmatpush1.msra.mxu0 0.0
      %606 = vmatprep.subr.mxu0 0.0
      %607 = vmatpush1.msra.mxu0 0.0
      %608 = vmatprep.subr.mxu0 0.0
      %609 = vmatpush1.msra.mxu0 0.0
      %610 = vmatprep.mubr.f32.mxu0 0.0
      %611 = vmatmul.mubr.f32.gmra.mrb[0].mxu0 %v372
      %v612 = vpop.f32.mrb[0].mxu0
      %v613 = vadd.f32 %v366, %v612
      %v614 = vpop.f32.mrb[0].mxu0
      %615 = vmatprep.mubr.f32.mxu0 0.0
      %616 = vmatmul.mubr.f32.gmra.mrb[0].mxu0 %v375
      %v617 = vpop.f32.mrb[0].mxu0
      %v618 = vadd.f32 %v367, %v617
      %v619 = vpop.f32.mrb[0].mxu0
      %620 = vmatprep.mubr.f32.mxu0 0.0
      %621 = vmatmul.mubr.f32.gmra.mrb[0].mxu0 %v378
      %v622 = vpop.f32.mrb[0].mxu0
      %v623 = vadd.f32 %v368, %v622
      %v624 = vpop.f32.mrb[0].mxu0
      %625 = vmatprep.mubr.f32.mxu0 0.0
      %626 = vmatmul.mubr.f32.gmra.mrb[0].mxu0 %v381
      %v627 = vpop.f32.mrb[0].mxu0
      %v628 = vadd.f32 %v369, %v627
      %v629 = vpop.f32.mrb[0].mxu0
      %630 = vdwg.mxu0
      %v631 = vadd.f32 %v454, %v613
      %v632 = vadd.f32 %v459, %v618
      %v633 = vadd.f32 %v464, %v623
      %v634 = vadd.f32 %v469, %v628
      %v635 = vsub.f32 0.0, %v631
      %v636 = vsub.f32 0.0, %v632
      %v637 = vsub.f32 0.0, %v633
      %v638 = vsub.f32 0.0, %v634
      %v639 = vmul.f32 %v635, 1.442695
      %v640 = vpow.pop %v639
      %v641 = vmul.f32 %v636, 1.442695
      %v642 = vpow.pop %v641
      %v643 = vmul.f32 %v637, 1.442695
      %v644 = vpow.pop %v643
      %v645 = vmul.f32 %v638, 1.442695
      %v646 = vpow.pop %v645
      %v647 = vadd.f32 %v640, 1.0
      %v648 = vadd.f32 %v642, 1.0
      %v649 = vadd.f32 %v644, 1.0
      %v650 = vadd.f32 %v646, 1.0
      %v651 = vrcp.pop %v647
      %v652 = vmul.f32 1.0, %v651
      %v653 = vrcp.pop %v648
      %v654 = vmul.f32 1.0, %v653
      %v655 = vrcp.pop %v649
      %v656 = vmul.f32 1.0, %v655
      %v657 = vrcp.pop %v650
      %v658 = vmul.f32 1.0, %v657
      %v659 = vadd.f32 %v652, 1.0
      %v660 = vadd.f32 %v654, 1.0
      %v661 = vadd.f32 %v656, 1.0
      %v662 = vadd.f32 %v658, 1.0
      %664 = vset.pattern.permute.xlu0 0
      %665 = vperm.xlu0 %664, %v659
      %v666 = vpop.permute.xlu0 %665
      %669 = vset.pattern.permute.xlu0 0
      %670 = vperm.xlu0 %669, %v660
      %v671 = vpop.permute.xlu0 %670
      %674 = vset.pattern.permute.xlu0 0
      %675 = vperm.xlu0 %674, %v661
      %v676 = vpop.permute.xlu0 %675
      %679 = vset.pattern.permute.xlu0 0
      %680 = vperm.xlu0 %679, %v662
      %v681 = vpop.permute.xlu0 %680
      %v683 = vmul.f32 %v225, %v666
      %v684 = vmul.f32 %v226, %v666
      %v685 = vmul.f32 %v227, %v666
      %v686 = vmul.f32 %v228, %v666
      %v687 = vmul.f32 %v229, %v671
      %v688 = vmul.f32 %v230, %v671
      %v689 = vmul.f32 %v231, %v671
      %v690 = vmul.f32 %v232, %v671
      %v691 = vmul.f32 %v233, %v676
      %v692 = vmul.f32 %v234, %v676
      %v693 = vmul.f32 %v235, %v676
      %v694 = vmul.f32 %v236, %v676
      %v695 = vmul.f32 %v237, %v681
      %v696 = vmul.f32 %v238, %v681
      %v697 = vmul.f32 %v239, %v681
      %v698 = vmul.f32 %v240, %v681
      %699 = vst [vmem:[%s224] sm:$0xff] %v683
      %700 = vst [vmem:[%s224 + $0x8] sm:$0xff] %v684
      %701 = vst [vmem:[%s224 + $0x10] sm:$0xff] %v685
      %702 = vst [vmem:[%s224 + $0x18] sm:$0xff] %v686
      %703 = vst [vmem:[%s224 + $0x20] sm:$0xff] %v687
      %704 = vst [vmem:[%s224 + $0x28] sm:$0xff] %v688
      %705 = vst [vmem:[%s224 + $0x30] sm:$0xff] %v689
      %706 = vst [vmem:[%s224 + $0x38] sm:$0xff] %v690
      %707 = vst [vmem:[%s224 + $0x40] sm:$0xff] %v691
      %708 = vst [vmem:[%s224 + $0x48] sm:$0xff] %v692
      %709 = vst [vmem:[%s224 + $0x50] sm:$0xff] %v693
      %710 = vst [vmem:[%s224 + $0x58] sm:$0xff] %v694
      %711 = vst [vmem:[%s224 + $0x60] sm:$0xff] %v695
      %712 = vst [vmem:[%s224 + $0x68] sm:$0xff] %v696
      %713 = vst [vmem:[%s224 + $0x70] sm:$0xff] %v697
      %714 = vst [vmem:[%s224 + $0x78] sm:$0xff] %v698
      %p715 = scmp.lt.s32.totalorder %s16, 1
      %s716 = scalar_select %p715, %s16, 1
      %s717 = smul.addr %s716, 16
      %s718 = smul.addr %s717, 8
      %s719 = scalar_lea.vmem %s5, %s718
      // Predicated region
      $region41: #{res_block.1} parent=39 // pred_check
        %p720 = pneg %p144
      $region42: #{res_block.1} parent=39 // pred_check_branch
        %722 = sbr.rel (%p720) target = $region44
      $region43: #{res_block.1} parent=39 // pred_region
        _
      $region44: #{res_block.1} parent=39 // pred_fallthru
        _
    $region40: #{res_block.1} parent=5 // pred_fallthru
      _
    %p723 = scmp.le.s32.totalorder 2, %s11
    // Predicated region
    $region45: #{res_block.1} parent=5 // pred_check
      %p724 = pneg %p723
    $region46: #{res_block.1} parent=5 // pred_check_branch
      %726 = sbr.rel (%p724) target = $region48
    $region47: #{res_block.1} parent=5 // pred_region
      %s727 = ssub.s32 %s11, 2
      // Predicated region
      $region49: #{res_block.1} parent=47 // pred_check
        %p728 = pneg %p150
      $region50: #{res_block.1} parent=47 // pred_check_branch
        %730 = sbr.rel (%p728) target = $region52
      $region51: #{res_block.1} parent=47 // pred_region
        %p731 = scmp.lt.s32.totalorder %s17, 1
        %s732 = scalar_select %p731, %s17, 1
        %s733 = smul.addr %s732, 16
        %s734 = smul.addr %s733, 8
        %s735 = scalar_lea.vmem %s5, %s734
      $region52: #{res_block.1} parent=47 // pred_fallthru
        _
    $region48: #{res_block.1} parent=5 // pred_fallthru
      _
  $region6: #{res_block.1} parent=0 // loop_footer
    %s15 = sadd.s32 1, %s11
  $region7: #{res_block.1} parent=0 // loop_footer_branch
    %10 = sbr.rel target = $region3
  $region8: #{res_block.1} parent=0 // loop_exit
    _

</llo_original>
